<compile_context>
chip_gen: v7x
topology: tpu7x:2x2x1
jax: 0.10.0
libtpu: 0.0.40
codegen_flags: <defaults>
</compile_context>

<pallas_src>
import functools

import jax
import jax.numpy as jnp
from jax.experimental import pallas as pl
from jax.experimental.pallas import tpu as pltpu

_HIDDEN = 768          # in_features of the replaced pooler.dense = nn.Linear(768, 1)
_SUB = 8               # weight row replicated onto 8 sublanes (MXU-friendly M)
_MAX_TILE_ROWS = 1024  # 1024 * 768 * 4 B = 3 MiB per input buffer; x2 when
                       # double-buffered -> safe on v5e/v6e/v7x VMEM budgets.


def _round_up(x, m):
    return (x + m - 1) // m * m


def _pooler_head_kernel(bias_ref, x_ref, w_ref, o_ref):
    """One row-tile of the pooler head: tanh(x @ w.T + b), lane-dense output.

    bias_ref: (1,)            SMEM  scalar bias
    x_ref:    (TILE_N, 768)   VMEM  hidden states for TILE_N rows
    w_ref:    (8, 768)        VMEM  pooler weight row, replicated on 8 sublanes
    o_ref:    (8, TILE_N)     VMEM  lane-dense result (all 8 rows identical)
    """
    # (8, D) @ (TILE_N, D)^T -> (8, TILE_N): contracts the hidden dim and puts the
    # row index in the *lane* dimension, so the writeback is lane-dense instead of
    # a (TILE_N, 1) column. Same contraction pattern as flash-attention's q @ k^T.
    acc = jax.lax.dot_general(
        w_ref[...],
        x_ref[...],
        dimension_numbers=(((1,), (1,)), ((), ())),
        preferred_element_type=jnp.float32,
    )
    # Bias + tanh (EUP slot; essentially free next to the HBM-bound DMA stream).
    o_ref[...] = jnp.tanh(acc + bias_ref[0]).astype(o_ref.dtype)


@functools.partial(jax.jit, static_argnames=("max_tile_rows",))
def _pooler_head(cls_hidden, weight, bias, *, max_tile_rows=_MAX_TILE_ROWS):
    """tanh(cls_hidden @ weight.T + bias) for cls_hidden of shape (N, 768) -> (N,)."""
    N, D = cls_hidden.shape

    # Row padding: single tile if it fits, otherwise 128-aligned tiles of
    # max_tile_rows rows (keeps every BlockSpec (8,128)-aligned).
    n_pad = _round_up(max(N, 1), 128)
    if n_pad <= max_tile_rows:
        tile_n = n_pad
    else:
        tile_n = max_tile_rows
        n_pad = _round_up(n_pad, tile_n)
    num_tiles = n_pad // tile_n

    x_pad = cls_hidden.astype(jnp.float32)
    if n_pad != N:
        x_pad = jnp.pad(x_pad, ((0, n_pad - N), (0, 0)))
    # Lane-dense weight block: dense (8, 768) rows instead of a (768, 1) column.
    w_rows = jnp.broadcast_to(weight.reshape(1, D).astype(jnp.float32), (_SUB, D))
    b = bias.reshape(1).astype(jnp.float32)

    out = pl.pallas_call(
        _pooler_head_kernel,
        out_shape=jax.ShapeDtypeStruct((_SUB, n_pad), jnp.float32),
        grid=(num_tiles,),
        in_specs=[
            pl.BlockSpec(memory_space=pltpu.SMEM),         # bias scalar
            pl.BlockSpec((tile_n, D), lambda i: (i, 0)),   # streamed row tile of x
            pl.BlockSpec((_SUB, D), lambda i: (0, 0)),     # weight rows (resident)
        ],
        out_specs=pl.BlockSpec((_SUB, tile_n), lambda i: (0, i)),  # lane-dense out
        compiler_params=pltpu.CompilerParams(
            dimension_semantics=("parallel",),             # shard grid on v7x 2xTC
            vmem_limit_bytes=32 * 1024 * 1024,
        ),
        cost_estimate=pl.CostEstimate(
            flops=2 * n_pad * D,
            bytes_accessed=n_pad * D * 4 + _SUB * n_pad * 4 + _SUB * D * 4 + 4,
            transcendentals=_SUB * n_pad,
        ),
    )(b, x_pad, w_rows)

    return out[0, :N]


def bert_pooler_forward(hidden_states, lengths, pooler_weight, pooler_bias):
    """Pallas equivalent of BertPooler.forward's custom pooler head.

    hidden_states: (B, S, 768) f32 -- BertModel last_hidden_state (the pretrained
                   encoder that produces it is not translated; see TODO above).
    lengths:       unused by the reference forward; accepted and ignored.
    pooler_weight: (1, 768) f32 (PyTorch nn.Linear(768, 1) layout).
    pooler_bias:   (1,) f32.

    Returns tanh(Linear(768, 1)(hidden_states[:, 0])).squeeze():
    shape (B,) f32 for B > 1, scalar for B == 1 (matches torch .squeeze()).
    """
    del lengths  # unused in the reference forward
    cls_hidden = hidden_states[:, 0, :]  # the pooler only reads the [CLS] token
    return jnp.squeeze(_pooler_head(cls_hidden, pooler_weight, pooler_bias))


if __name__ == "__main__":
    key = jax.random.PRNGKey(0)
    kh, kw, kb = jax.random.split(key, 3)

    # Small shapes; hidden size is fixed at 768 by nn.Linear(768, 1).
    B, S, D = 4, 8, _HIDDEN
    # Stand-in for BertModel(x)[0] (last_hidden_state) -- the pretrained encoder
    # itself is outside the scope of this kernel.
    hidden_states = jax.random.normal(kh, (B, S, D), dtype=jnp.float32)
    lengths = jnp.full((B,), S, dtype=jnp.int32)

    # Deterministic parameter init (same shapes as nn.Linear(768, 1)).
    bound = 1.0 / (D ** 0.5)
    weight = jax.random.uniform(kw, (1, D), minval=-bound, maxval=bound,
                                dtype=jnp.float32)
    bias = jax.random.uniform(kb, (1,), minval=-bound, maxval=bound,
                              dtype=jnp.float32)

    out = bert_pooler_forward(hidden_states, lengths, weight, bias)
    out = jax.block_until_ready(out)

    # Sanity check against a plain-JAX reference of the pooler head.
    ref = jnp.tanh(hidden_states[:, 0, :] @ weight[0] + bias[0])
    assert out.shape == (B,), out.shape
    assert jnp.allclose(out, ref, atol=1e-4, rtol=1e-4), float(
        jnp.max(jnp.abs(out - ref)))

    print("KERNEL_OK")
</pallas_src>

<mosaic_0001>
module attributes {stable_mosaic.version = 11 : i64} {
  func.func @_pooler_head_kernel(%arg0: i32, %arg1: memref<1xf32, #tpu.memory_space<smem>>, %arg2: memref<128x768xf32, #tpu.memory_space<vmem>>, %arg3: memref<8x768xf32, #tpu.memory_space<vmem>>, %arg4: memref<8x128xf32, #tpu.memory_space<vmem>>) attributes {dimension_semantics = [#tpu.dimension_semantics<parallel>], iteration_bounds = array<i64: 1>, scalar_prefetch = 0 : i64, scratch_operands = 0 : i64, tpu.core_type = #tpu.core_type<tc>, window_params = [{transform_indices = @transform_0, window_bounds = array<i64: 1>}, {transform_indices = @transform_1, window_bounds = array<i64: 128, 768>}, {pipeline_mode = #tpu.pipeline_mode<synchronous>, transform_indices = @transform_2, window_bounds = array<i64: 8, 768>}, {transform_indices = @transform_3, window_bounds = array<i64: 8, 128>}]} {
    %c0 = arith.constant 0 : index
    %c0_0 = arith.constant 0 : index
    %0 = vector.load %arg3[%c0, %c0_0] : memref<8x768xf32, #tpu.memory_space<vmem>>, vector<8x768xf32>
    %c0_1 = arith.constant 0 : index
    %c0_2 = arith.constant 0 : index
    %1 = vector.load %arg2[%c0_1, %c0_2] : memref<128x768xf32, #tpu.memory_space<vmem>>, vector<128x768xf32>
    %cst = arith.constant dense<0.000000e+00> : vector<8x128xf32>
    %2 = tpu.matmul %0, %1, %cst {dimension_numbers = #tpu.dot_dimension_numbers<[1], [1], [0], [0], [0, 0, 1, 0], [], []>} : vector<8x768xf32>, vector<128x768xf32>, vector<8x128xf32> -> vector<8x128xf32>
    %c0_3 = arith.constant 0 : index
    %3 = memref.load %arg1[%c0_3] : memref<1xf32, #tpu.memory_space<smem>>
    %4 = vector.broadcast %3 : f32 to vector<8x128xf32>
    %5 = arith.addf %2, %4 : vector<8x128xf32>
    %6 = math.tanh %5 : vector<8x128xf32>
    %c0_4 = arith.constant 0 : index
    %c0_5 = arith.constant 0 : index
    %7 = vector.load %arg4[%c0_4, %c0_5] : memref<8x128xf32, #tpu.memory_space<vmem>>, vector<8x128xf32>
    tpu.vector_store %arg4[%c0_4, %c0_5], %6 {strides = array<i32>} : memref<8x128xf32, #tpu.memory_space<vmem>>, vector<8x128xf32>,
    return
  }
  func.func @transform_0(%arg0: i32) -> i32 {
    %c0_i32 = arith.constant 0 : i32
    %c0_i32_0 = arith.constant 0 : i32
    return %c0_i32 : i32
  }
  func.func @transform_1(%arg0: i32) -> (i32, i32) {
    %c0_i32 = arith.constant 0 : i32
    %c0_i32_0 = arith.constant 0 : i32
    return %arg0, %c0_i32 : i32, i32
  }
  func.func @transform_2(%arg0: i32) -> (i32, i32) {
    %c0_i32 = arith.constant 0 : i32
    %c0_i32_0 = arith.constant 0 : i32
    %c0_i32_1 = arith.constant 0 : i32
    return %c0_i32, %c0_i32_0 : i32, i32
  }
  func.func @transform_3(%arg0: i32) -> (i32, i32) {
    %c0_i32 = arith.constant 0 : i32
    %c0_i32_0 = arith.constant 0 : i32
    return %c0_i32, %arg0 : i32, i32
  }
}

</mosaic_0001>

<llo_original>
// kernel: _pooler_head.1
$region0: #{_pooler_head.1}
  #allocation0 [shape = 'u32[]', space=smem, size = 0x4, offset = 0x4, fixed_abs, tag = 'smem constant byte address 0x4 - core index']
  #allocation1 [shape = 'u32[144,128]{1,0:T(1,128)}', space=vmem, size = 0x12000, scoped, tag = 'internal scratch']
  #allocation2 [shape = 'f32[1]{0:T(128)S(6)}', space=smem, size = 0x200, scoped, tag = 'scoped memory for _pooler_head.1']
  %s0 = inlined_call_operand.<no memory space> [shape: f32[1], index: 0, kind: input, shape index: {}]
  %s1 = inlined_call_operand.vmem [shape: f32[128,768], index: 1, kind: input, shape index: {}]
  %s2 = inlined_call_operand.vmem [shape: f32[8,768], index: 2, kind: input, shape index: {}]
  %s3 = inlined_call_operand.vmem [shape: f32[8,128], index: 3, kind: output, shape index: {}]
  %s4 = sld [smem:[#allocation0]]
  $region22: #{_pooler_head.1} parent=0
    _
  %s6 = ssub.s32 1, %s4
  %s7 = scalar_select 0, %s6, %s4
  %8 = sst [smem:[#allocation2]] %s0
  // Predicated region
  $region2: #{_pooler_head.1} parent=0 // pred_check
    _
  $region3: #{_pooler_head.1} parent=0 // pred_check_branch
    %10 = sbr.rel (0) target = $region5
  $region4: #{_pooler_head.1} parent=0 // pred_region
    _
  $region5: #{_pooler_head.1} parent=0 // pred_fallthru
    _
  // Predicated region
  $region6: #{_pooler_head.1} parent=0 // pred_check
    _
  $region7: #{_pooler_head.1} parent=0 // pred_check_branch
    %12 = sbr.rel (0) target = $region9
  $region8: #{_pooler_head.1} parent=0 // pred_region
    _
  $region9: #{_pooler_head.1} parent=0 // pred_fallthru
    _
  // Predicated region
  $region10: #{_pooler_head.1} parent=0 // pred_check
    _
  $region11: #{_pooler_head.1} parent=0 // pred_check_branch
    %14 = sbr.rel (0) target = $region13
  $region12: #{_pooler_head.1} parent=0 // pred_region
    _
  $region13: #{_pooler_head.1} parent=0 // pred_fallthru
    _
  %v15 = vld [vmem:[%s2] sm:$0xff]
  %v16 = vld [vmem:[%s2 + $0x8] sm:$0xff]
  %v17 = vld [vmem:[%s2 + $0x10] sm:$0xff]
  %v18 = vld [vmem:[%s2 + $0x18] sm:$0xff]
  %v19 = vld [vmem:[%s2 + $0x20] sm:$0xff]
  %v20 = vld [vmem:[%s2 + $0x28] sm:$0xff]
  %v21 = vld [vmem:[%s1] sm:$0xff]
  %v22 = vld [vmem:[%s1 + $0x8] sm:$0xff]
  %v23 = vld [vmem:[%s1 + $0x10] sm:$0xff]
  %v24 = vld [vmem:[%s1 + $0x18] sm:$0xff]
  %v25 = vld [vmem:[%s1 + $0x20] sm:$0xff]
  %v26 = vld [vmem:[%s1 + $0x28] sm:$0xff]
  %v27 = vld [vmem:[%s1 + $0x30] sm:$0xff]
  %v28 = vld [vmem:[%s1 + $0x38] sm:$0xff]
  %v29 = vld [vmem:[%s1 + $0x40] sm:$0xff]
  %v30 = vld [vmem:[%s1 + $0x48] sm:$0xff]
  %v31 = vld [vmem:[%s1 + $0x50] sm:$0xff]
  %v32 = vld [vmem:[%s1 + $0x58] sm:$0xff]
  %v33 = vld [vmem:[%s1 + $0x60] sm:$0xff]
  %v34 = vld [vmem:[%s1 + $0x68] sm:$0xff]
  %v35 = vld [vmem:[%s1 + $0x70] sm:$0xff]
  %v36 = vld [vmem:[%s1 + $0x78] sm:$0xff]
  %v37 = vld [vmem:[%s1 + $0x80] sm:$0xff]
  %v38 = vld [vmem:[%s1 + $0x88] sm:$0xff]
  %v39 = vld [vmem:[%s1 + $0x90] sm:$0xff]
  %v40 = vld [vmem:[%s1 + $0x98] sm:$0xff]
  %v41 = vld [vmem:[%s1 + $0xa0] sm:$0xff]
  %v42 = vld [vmem:[%s1 + $0xa8] sm:$0xff]
  %v43 = vld [vmem:[%s1 + $0xb0] sm:$0xff]
  %v44 = vld [vmem:[%s1 + $0xb8] sm:$0xff]
  %v45 = vld [vmem:[%s1 + $0xc0] sm:$0xff]
  %v46 = vld [vmem:[%s1 + $0xc8] sm:$0xff]
  %v47 = vld [vmem:[%s1 + $0xd0] sm:$0xff]
  %v48 = vld [vmem:[%s1 + $0xd8] sm:$0xff]
  %v49 = vld [vmem:[%s1 + $0xe0] sm:$0xff]
  %v50 = vld [vmem:[%s1 + $0xe8] sm:$0xff]
  %v51 = vld [vmem:[%s1 + $0xf0] sm:$0xff]
  %v52 = vld [vmem:[%s1 + $0xf8] sm:$0xff]
  %v53 = vld [vmem:[%s1 + $0x100] sm:$0xff]
  %v54 = vld [vmem:[%s1 + $0x108] sm:$0xff]
  %v55 = vld [vmem:[%s1 + $0x110] sm:$0xff]
  %v56 = vld [vmem:[%s1 + $0x118] sm:$0xff]
  %v57 = vld [vmem:[%s1 + $0x120] sm:$0xff]
  %v58 = vld [vmem:[%s1 + $0x128] sm:$0xff]
  %v59 = vld [vmem:[%s1 + $0x130] sm:$0xff]
  %v60 = vld [vmem:[%s1 + $0x138] sm:$0xff]
  %v61 = vld [vmem:[%s1 + $0x140] sm:$0xff]
  %v62 = vld [vmem:[%s1 + $0x148] sm:$0xff]
  %v63 = vld [vmem:[%s1 + $0x150] sm:$0xff]
  %v64 = vld [vmem:[%s1 + $0x158] sm:$0xff]
  %v65 = vld [vmem:[%s1 + $0x160] sm:$0xff]
  %v66 = vld [vmem:[%s1 + $0x168] sm:$0xff]
  %v67 = vld [vmem:[%s1 + $0x170] sm:$0xff]
  %v68 = vld [vmem:[%s1 + $0x178] sm:$0xff]
  %v69 = vld [vmem:[%s1 + $0x180] sm:$0xff]
  %v70 = vld [vmem:[%s1 + $0x188] sm:$0xff]
  %v71 = vld [vmem:[%s1 + $0x190] sm:$0xff]
  %v72 = vld [vmem:[%s1 + $0x198] sm:$0xff]
  %v73 = vld [vmem:[%s1 + $0x1a0] sm:$0xff]
  %v74 = vld [vmem:[%s1 + $0x1a8] sm:$0xff]
  %v75 = vld [vmem:[%s1 + $0x1b0] sm:$0xff]
  %v76 = vld [vmem:[%s1 + $0x1b8] sm:$0xff]
  %v77 = vld [vmem:[%s1 + $0x1c0] sm:$0xff]
  %v78 = vld [vmem:[%s1 + $0x1c8] sm:$0xff]
  %v79 = vld [vmem:[%s1 + $0x1d0] sm:$0xff]
  %v80 = vld [vmem:[%s1 + $0x1d8] sm:$0xff]
  %v81 = vld [vmem:[%s1 + $0x1e0] sm:$0xff]
  %v82 = vld [vmem:[%s1 + $0x1e8] sm:$0xff]
  %v83 = vld [vmem:[%s1 + $0x1f0] sm:$0xff]
  %v84 = vld [vmem:[%s1 + $0x1f8] sm:$0xff]
  %v85 = vld [vmem:[%s1 + $0x200] sm:$0xff]
  %v86 = vld [vmem:[%s1 + $0x208] sm:$0xff]
  %v87 = vld [vmem:[%s1 + $0x210] sm:$0xff]
  %v88 = vld [vmem:[%s1 + $0x218] sm:$0xff]
  %v89 = vld [vmem:[%s1 + $0x220] sm:$0xff]
  %v90 = vld [vmem:[%s1 + $0x228] sm:$0xff]
  %v91 = vld [vmem:[%s1 + $0x230] sm:$0xff]
  %v92 = vld [vmem:[%s1 + $0x238] sm:$0xff]
  %v93 = vld [vmem:[%s1 + $0x240] sm:$0xff]
  %v94 = vld [vmem:[%s1 + $0x248] sm:$0xff]
  %v95 = vld [vmem:[%s1 + $0x250] sm:$0xff]
  %v96 = vld [vmem:[%s1 + $0x258] sm:$0xff]
  %v97 = vld [vmem:[%s1 + $0x260] sm:$0xff]
  %v98 = vld [vmem:[%s1 + $0x268] sm:$0xff]
  %v99 = vld [vmem:[%s1 + $0x270] sm:$0xff]
  %v100 = vld [vmem:[%s1 + $0x278] sm:$0xff]
  %v101 = vld [vmem:[%s1 + $0x280] sm:$0xff]
  %v102 = vld [vmem:[%s1 + $0x288] sm:$0xff]
  %v103 = vld [vmem:[%s1 + $0x290] sm:$0xff]
  %v104 = vld [vmem:[%s1 + $0x298] sm:$0xff]
  %v105 = vld [vmem:[%s1 + $0x2a0] sm:$0xff]
  %v106 = vld [vmem:[%s1 + $0x2a8] sm:$0xff]
  %v107 = vld [vmem:[%s1 + $0x2b0] sm:$0xff]
  %v108 = vld [vmem:[%s1 + $0x2b8] sm:$0xff]
  %v109 = vld [vmem:[%s1 + $0x2c0] sm:$0xff]
  %v110 = vld [vmem:[%s1 + $0x2c8] sm:$0xff]
  %v111 = vld [vmem:[%s1 + $0x2d0] sm:$0xff]
  %v112 = vld [vmem:[%s1 + $0x2d8] sm:$0xff]
  %v113 = vld [vmem:[%s1 + $0x2e0] sm:$0xff]
  %v114 = vld [vmem:[%s1 + $0x2e8] sm:$0xff]
  %v115 = vld [vmem:[%s1 + $0x2f0] sm:$0xff]
  %v116 = vld [vmem:[%s1 + $0x2f8] sm:$0xff]
  %s117 = sld [smem:[#allocation2]]
  %v118 = vstv %s117
  %119 = vmatprep.subr.mxu0 %v22
  %120 = vmatpush1.xpose.msra.mxu0 %v21
  %121 = vmatprep.subr.mxu0 %v28
  %122 = vmatpush1.xpose.msra.mxu0 %v27
  %123 = vmatprep.subr.mxu0 %v34
  %124 = vmatpush1.xpose.msra.mxu0 %v33
  %125 = vmatprep.subr.mxu0 %v40
  %126 = vmatpush1.xpose.msra.mxu0 %v39
  %127 = vmatprep.subr.mxu0 %v46
  %128 = vmatpush1.xpose.msra.mxu0 %v45
  %129 = vmatprep.subr.mxu0 %v52
  %130 = vmatpush1.xpose.msra.mxu0 %v51
  %131 = vmatprep.subr.mxu0 %v58
  %132 = vmatpush1.xpose.msra.mxu0 %v57
  %133 = vmatprep.subr.mxu0 %v64
  %134 = vmatpush1.xpose.msra.mxu0 %v63
  %135 = vmatprep.subr.mxu0 %v70
  %136 = vmatpush1.xpose.msra.mxu0 %v69
  %137 = vmatprep.subr.mxu0 %v76
  %138 = vmatpush1.xpose.msra.mxu0 %v75
  %139 = vmatprep.subr.mxu0 %v82
  %140 = vmatpush1.xpose.msra.mxu0 %v81
  %141 = vmatprep.subr.mxu0 %v88
  %142 = vmatpush1.xpose.msra.mxu0 %v87
  %143 = vmatprep.subr.mxu0 %v94
  %144 = vmatpush1.xpose.msra.mxu0 %v93
  %145 = vmatprep.subr.mxu0 %v100
  %146 = vmatpush1.xpose.msra.mxu0 %v99
  %147 = vmatprep.subr.mxu0 %v106
  %148 = vmatpush1.xpose.msra.mxu0 %v105
  %149 = vmatprep.subr.mxu0 %v112
  %150 = vmatpush1.xpose.msra.mxu0 %v111
  %151 = vmatprep.subr.mxu0 0.0
  %152 = vmatpush1.xpose.msra.mxu0 0.0
  %153 = vmatprep.subr.mxu0 0.0
  %154 = vmatpush1.xpose.msra.mxu0 0.0
  %155 = vmatprep.subr.mxu0 0.0
  %156 = vmatpush1.xpose.msra.mxu0 0.0
  %157 = vmatprep.subr.mxu0 0.0
  %158 = vmatpush1.xpose.msra.mxu0 0.0
  %159 = vmatprep.subr.mxu0 0.0
  %160 = vmatpush1.xpose.msra.mxu0 0.0
  %161 = vmatprep.subr.mxu0 0.0
  %162 = vmatpush1.xpose.msra.mxu0 0.0
  %163 = vmatprep.subr.mxu0 0.0
  %164 = vmatpush1.xpose.msra.mxu0 0.0
  %165 = vmatprep.subr.mxu0 0.0
  %166 = vmatpush1.xpose.msra.mxu0 0.0
  %167 = vmatprep.subr.mxu0 0.0
  %168 = vmatpush1.xpose.msra.mxu0 0.0
  %169 = vmatprep.subr.mxu0 0.0
  %170 = vmatpush1.xpose.msra.mxu0 0.0
  %171 = vmatprep.subr.mxu0 0.0
  %172 = vmatpush1.xpose.msra.mxu0 0.0
  %173 = vmatprep.subr.mxu0 0.0
  %174 = vmatpush1.xpose.msra.mxu0 0.0
  %175 = vmatprep.subr.mxu0 0.0
  %176 = vmatpush1.xpose.msra.mxu0 0.0
  %177 = vmatprep.subr.mxu0 0.0
  %178 = vmatpush1.xpose.msra.mxu0 0.0
  %179 = vmatprep.subr.mxu0 0.0
  %180 = vmatpush1.xpose.msra.mxu0 0.0
  %181 = vmatprep.subr.mxu0 0.0
  %182 = vmatpush1.xpose.msra.mxu0 0.0
  %183 = vmatprep.mubr.f32.mxu0 %v16
  %184 = vmatmul.mubr.f32.gmra.mrb[0].mxu0 %v15
  %v185 = vpop.f32.mrb[0].mxu0
  %v186 = vadd.f32 %v118, %v185
  %v187 = vpop.f32.mrb[0].mxu0
  %188 = vdwg.mxu0
  %189 = vmatprep.subr.mxu0 %v24
  %190 = vmatpush1.xpose.msra.mxu0 %v23
  %191 = vmatprep.subr.mxu0 %v30
  %192 = vmatpush1.xpose.msra.mxu0 %v29
  %193 = vmatprep.subr.mxu0 %v36
  %194 = vmatpush1.xpose.msra.mxu0 %v35
  %195 = vmatprep.subr.mxu0 %v42
  %196 = vmatpush1.xpose.msra.mxu0 %v41
  %197 = vmatprep.subr.mxu0 %v48
  %198 = vmatpush1.xpose.msra.mxu0 %v47
  %199 = vmatprep.subr.mxu0 %v54
  %200 = vmatpush1.xpose.msra.mxu0 %v53
  %201 = vmatprep.subr.mxu0 %v60
  %202 = vmatpush1.xpose.msra.mxu0 %v59
  %203 = vmatprep.subr.mxu0 %v66
  %204 = vmatpush1.xpose.msra.mxu0 %v65
  %205 = vmatprep.subr.mxu0 %v72
  %206 = vmatpush1.xpose.msra.mxu0 %v71
  %207 = vmatprep.subr.mxu0 %v78
  %208 = vmatpush1.xpose.msra.mxu0 %v77
  %209 = vmatprep.subr.mxu0 %v84
  %210 = vmatpush1.xpose.msra.mxu0 %v83
  %211 = vmatprep.subr.mxu0 %v90
  %212 = vmatpush1.xpose.msra.mxu0 %v89
  %213 = vmatprep.subr.mxu0 %v96
  %214 = vmatpush1.xpose.msra.mxu0 %v95
  %215 = vmatprep.subr.mxu0 %v102
  %216 = vmatpush1.xpose.msra.mxu0 %v101
  %217 = vmatprep.subr.mxu0 %v108
  %218 = vmatpush1.xpose.msra.mxu0 %v107
  %219 = vmatprep.subr.mxu0 %v114
  %220 = vmatpush1.xpose.msra.mxu0 %v113
  %221 = vmatprep.subr.mxu0 0.0
  %222 = vmatpush1.xpose.msra.mxu0 0.0
  %223 = vmatprep.subr.mxu0 0.0
  %224 = vmatpush1.xpose.msra.mxu0 0.0
  %225 = vmatprep.subr.mxu0 0.0
  %226 = vmatpush1.xpose.msra.mxu0 0.0
  %227 = vmatprep.subr.mxu0 0.0
  %228 = vmatpush1.xpose.msra.mxu0 0.0
  %229 = vmatprep.subr.mxu0 0.0
  %230 = vmatpush1.xpose.msra.mxu0 0.0
  %231 = vmatprep.subr.mxu0 0.0
  %232 = vmatpush1.xpose.msra.mxu0 0.0
  %233 = vmatprep.subr.mxu0 0.0
  %234 = vmatpush1.xpose.msra.mxu0 0.0
  %235 = vmatprep.subr.mxu0 0.0
  %236 = vmatpush1.xpose.msra.mxu0 0.0
  %237 = vmatprep.subr.mxu0 0.0
  %238 = vmatpush1.xpose.msra.mxu0 0.0
  %239 = vmatprep.subr.mxu0 0.0
  %240 = vmatpush1.xpose.msra.mxu0 0.0
  %241 = vmatprep.subr.mxu0 0.0
  %242 = vmatpush1.xpose.msra.mxu0 0.0
  %243 = vmatprep.subr.mxu0 0.0
  %244 = vmatpush1.xpose.msra.mxu0 0.0
  %245 = vmatprep.subr.mxu0 0.0
  %246 = vmatpush1.xpose.msra.mxu0 0.0
  %247 = vmatprep.subr.mxu0 0.0
  %248 = vmatpush1.xpose.msra.mxu0 0.0
  %249 = vmatprep.subr.mxu0 0.0
  %250 = vmatpush1.xpose.msra.mxu0 0.0
  %251 = vmatprep.subr.mxu0 0.0
  %252 = vmatpush1.xpose.msra.mxu0 0.0
  %253 = vmatprep.mubr.f32.mxu0 %v18
  %254 = vmatmul.mubr.f32.gmra.mrb[0].mxu0 %v17
  %v255 = vpop.f32.mrb[0].mxu0
  %v256 = vadd.f32 %v186, %v255
  %v257 = vpop.f32.mrb[0].mxu0
  %258 = vdwg.mxu0
  %259 = vmatprep.subr.mxu0 %v26
  %260 = vmatpush1.xpose.msra.mxu0 %v25
  %261 = vmatprep.subr.mxu0 %v32
  %262 = vmatpush1.xpose.msra.mxu0 %v31
  %263 = vmatprep.subr.mxu0 %v38
  %264 = vmatpush1.xpose.msra.mxu0 %v37
  %265 = vmatprep.subr.mxu0 %v44
  %266 = vmatpush1.xpose.msra.mxu0 %v43
  %267 = vmatprep.subr.mxu0 %v50
  %268 = vmatpush1.xpose.msra.mxu0 %v49
  %269 = vmatprep.subr.mxu0 %v56
  %270 = vmatpush1.xpose.msra.mxu0 %v55
  %271 = vmatprep.subr.mxu0 %v62
  %272 = vmatpush1.xpose.msra.mxu0 %v61
  %273 = vmatprep.subr.mxu0 %v68
  %274 = vmatpush1.xpose.msra.mxu0 %v67
  %275 = vmatprep.subr.mxu0 %v74
  %276 = vmatpush1.xpose.msra.mxu0 %v73
  %277 = vmatprep.subr.mxu0 %v80
  %278 = vmatpush1.xpose.msra.mxu0 %v79
  %279 = vmatprep.subr.mxu0 %v86
  %280 = vmatpush1.xpose.msra.mxu0 %v85
  %281 = vmatprep.subr.mxu0 %v92
  %282 = vmatpush1.xpose.msra.mxu0 %v91
  %283 = vmatprep.subr.mxu0 %v98
  %284 = vmatpush1.xpose.msra.mxu0 %v97
  %285 = vmatprep.subr.mxu0 %v104
  %286 = vmatpush1.xpose.msra.mxu0 %v103
  %287 = vmatprep.subr.mxu0 %v110
  %288 = vmatpush1.xpose.msra.mxu0 %v109
  %289 = vmatprep.subr.mxu0 %v116
  %290 = vmatpush1.xpose.msra.mxu0 %v115
  %291 = vmatprep.subr.mxu0 0.0
  %292 = vmatpush1.xpose.msra.mxu0 0.0
  %293 = vmatprep.subr.mxu0 0.0
  %294 = vmatpush1.xpose.msra.mxu0 0.0
  %295 = vmatprep.subr.mxu0 0.0
  %296 = vmatpush1.xpose.msra.mxu0 0.0
  %297 = vmatprep.subr.mxu0 0.0
  %298 = vmatpush1.xpose.msra.mxu0 0.0
  %299 = vmatprep.subr.mxu0 0.0
  %300 = vmatpush1.xpose.msra.mxu0 0.0
  %301 = vmatprep.subr.mxu0 0.0
  %302 = vmatpush1.xpose.msra.mxu0 0.0
  %303 = vmatprep.subr.mxu0 0.0
  %304 = vmatpush1.xpose.msra.mxu0 0.0
  %305 = vmatprep.subr.mxu0 0.0
  %306 = vmatpush1.xpose.msra.mxu0 0.0
  %307 = vmatprep.subr.mxu0 0.0
  %308 = vmatpush1.xpose.msra.mxu0 0.0
  %309 = vmatprep.subr.mxu0 0.0
  %310 = vmatpush1.xpose.msra.mxu0 0.0
  %311 = vmatprep.subr.mxu0 0.0
  %312 = vmatpush1.xpose.msra.mxu0 0.0
  %313 = vmatprep.subr.mxu0 0.0
  %314 = vmatpush1.xpose.msra.mxu0 0.0
  %315 = vmatprep.subr.mxu0 0.0
  %316 = vmatpush1.xpose.msra.mxu0 0.0
  %317 = vmatprep.subr.mxu0 0.0
  %318 = vmatpush1.xpose.msra.mxu0 0.0
  %319 = vmatprep.subr.mxu0 0.0
  %320 = vmatpush1.xpose.msra.mxu0 0.0
  %321 = vmatprep.subr.mxu0 0.0
  %322 = vmatpush1.xpose.msra.mxu0 0.0
  %323 = vmatprep.mubr.f32.mxu0 %v20
  %324 = vmatmul.mubr.f32.gmra.mrb[0].mxu0 %v19
  %v325 = vpop.f32.mrb[0].mxu0
  %v326 = vadd.f32 %v256, %v325
  %v327 = vpop.f32.mrb[0].mxu0
  %328 = vdwg.mxu0
  %v329 = vtanh.pop %v326
  %330 = vst [vmem:[%s3] sm:$0xff] %v329
  // Predicated region
  $region14: #{_pooler_head.1} parent=0 // pred_check
    _
  $region15: #{_pooler_head.1} parent=0 // pred_check_branch
    %332 = sbr.rel (0) target = $region17
  $region16: #{_pooler_head.1} parent=0 // pred_region
    _
  $region17: #{_pooler_head.1} parent=0 // pred_fallthru
    _
  // Predicated region
  $region18: #{_pooler_head.1} parent=0 // pred_check
    _
  $region19: #{_pooler_head.1} parent=0 // pred_check_branch
    %334 = sbr.rel (0) target = $region21
  $region20: #{_pooler_head.1} parent=0 // pred_region
    _
  $region21: #{_pooler_head.1} parent=0 // pred_fallthru
    _

</llo_original>
